<compile_context>
chip_gen: v6e
topology: v6e:2x2x1
jax: 0.10.0
libtpu: 0.0.40
codegen_flags: <defaults>
</compile_context>

<pallas_src>
import functools

import jax
import jax.numpy as jnp
from jax import lax
from jax.experimental import pallas as pl
from jax.experimental.pallas import tpu as pltpu

EPS = 1e-5


def _ibn_kernel(gamma_ref, beta_ref, x_ref, o_ref, *, half):
    """One grid step processes a (N, bc, HW) slab of channels."""
    _, bc, hw = x_ref.shape
    c0 = pl.multiple_of(pl.program_id(0) * bc, bc)

    # For f32 inputs this cast is a no-op; the block budget already assumes
    # 4 bytes/element so sub-32-bit inputs stay within the accounted footprint.
    x = x_ref[...].astype(jnp.float32)                      # (N, bc, HW)

    # Single pass over the resident block: per-(n, c) partial sums over HW.
    inv_hw = jnp.float32(1.0 / hw)
    s = jnp.sum(x, axis=-1, keepdims=True)                  # (N, bc, 1)
    ss = jnp.sum(x * x, axis=-1, keepdims=True)             # (N, bc, 1)

    # InstanceNorm stats: per (n, c) over HW.
    mean_in = s * inv_hw
    ex2_in = ss * inv_hw
    var_in = ex2_in - mean_in * mean_in                     # (N, bc, 1)

    # BatchNorm stats: per c over N*HW, derived from the same partial sums.
    mean_bn = jnp.mean(mean_in, axis=0, keepdims=True)      # (1, bc, 1)
    ex2_bn = jnp.mean(ex2_in, axis=0, keepdims=True)
    var_bn = ex2_bn - mean_bn * mean_bn                     # (1, bc, 1)

    # Per-channel IN/BN selection (handles blocks straddling the split).
    ch = c0 + lax.broadcasted_iota(jnp.int32, (1, bc, 1), 1)
    is_in = ch < half                                       # (1, bc, 1)

    mean = jnp.where(is_in, mean_in, mean_bn)               # (N, bc, 1)
    var = jnp.where(is_in, var_in, var_bn)                  # (N, bc, 1)
    var = jnp.maximum(var, 0.0)                             # guard cancellation -> NaN

    # Resident (C, 1) affine params; slice this slab's channels.
    gamma = gamma_ref[pl.ds(c0, bc), :].astype(jnp.float32).reshape(1, bc, 1)
    beta = beta_ref[pl.ds(c0, bc), :].astype(jnp.float32).reshape(1, bc, 1)

    # Fold to one multiply-add per element: o = x * scale + shift.
    scale = lax.rsqrt(var + EPS) * gamma                    # (N, bc, 1)
    shift = beta - mean * scale                             # (N, bc, 1)
    o_ref[...] = (x * scale + shift).astype(o_ref.dtype)


def _vmem_limits():
    """(per-block budget bytes, vmem_limit_bytes), generation-aware."""
    cap = None
    try:
        info = pltpu.get_tpu_info()
        cap = getattr(info, "vmem_capacity_bytes", None)
    except Exception:
        cap = None
    if not cap:
        cap = 64 * 1024 * 1024  # conservative default: v7x per-TC VMEM
    vmem_limit = min((int(cap) * 3) // 4, 112 * 1024 * 1024)
    # 2x double-buffered input + 2x output blocks + in-kernel f32 temporaries.
    block_budget = vmem_limit // 8
    return int(block_budget), int(vmem_limit)


def _choose_bc(n, c, hw, dtype, block_budget_bytes, *, min_steps=4):
    """Channel-slab width: divides C, sublane-friendly, fits VMEM, keeps >= min_steps."""
    itemsize = jnp.dtype(dtype).itemsize
    sub = {4: 8, 2: 16, 1: 32}.get(itemsize, 8)   # dtype-aware sublane multiple
    candidates = [bc for bc in range(1, c + 1)
                  if c % bc == 0 and (bc % sub == 0 or bc == c)]
    # Budget with the f32 compute width (kernel materializes f32 intermediates).
    bytes_per_elem = max(4, itemsize)

    def fits(bc):
        return n * bc * hw * bytes_per_elem <= block_budget_bytes

    # Prefer slabs that leave >= min_steps grid steps: cross-step DMA overlap
    # (read of block i+1 hides writeback of block i-1) and v7x megacore sharding.
    pipelined = [bc for bc in candidates if fits(bc) and c // bc >= min_steps]
    if pipelined:
        return max(pipelined)
    fitting = [bc for bc in candidates if fits(bc)]
    if fitting:
        return max(fitting)
    # TODO(synk): for very large N*HW, add a second ("arbitrary") grid axis over N
    # with a two-phase stats-accumulate / normalize pass instead of raising.
    raise ValueError(
        f"IBN Pallas kernel: even the smallest legal channel slab "
        f"(bc={min(candidates)}) exceeds the per-block VMEM budget "
        f"({block_budget_bytes} bytes) for N={n}, HW={hw}, dtype={dtype}."
    )


def ibn_forward(x_nchw, in_weight, in_bias, bn_weight, bn_bias, *,
                ratio=0.5, donate_input=False):
    N, C, H, W = x_nchw.shape
    half = int(C * ratio)
    HW = H * W

    # (N, C, H, W) -> (N, C, H*W): pure reshape, no data movement.
    x_ncl = x_nchw.reshape(N, C, HW)

    # Per-channel affine params, IN-half then BN-half, shape (C, 1).
    gamma = jnp.concatenate([in_weight, bn_weight]).astype(jnp.float32).reshape(C, 1)
    beta = jnp.concatenate([in_bias, bn_bias]).astype(jnp.float32).reshape(C, 1)

    block_budget, vmem_limit = _vmem_limits()
    bc = _choose_bc(N, C, HW, x_nchw.dtype, block_budget)
    kernel = functools.partial(_ibn_kernel, half=half)

    out = pl.pallas_call(
        kernel,
        out_shape=jax.ShapeDtypeStruct((N, C, HW), x_nchw.dtype),
        grid_spec=pltpu.PrefetchScalarGridSpec(
            num_scalar_prefetch=0,
            grid=(C // bc,),
            in_specs=[
                pl.BlockSpec((C, 1), lambda c: (0, 0)),          # gamma, resident
                pl.BlockSpec((C, 1), lambda c: (0, 0)),          # beta, resident
                pl.BlockSpec((N, bc, HW), lambda c: (0, c, 0)),  # x slab
            ],
            out_specs=pl.BlockSpec((N, bc, HW), lambda c: (0, c, 0)),
        ),
        compiler_params=pltpu.CompilerParams(
            dimension_semantics=("parallel",),
            vmem_limit_bytes=vmem_limit,
        ),
        # Reuse x's HBM buffer for the output when the caller can donate it.
        input_output_aliases=({2: 0} if donate_input else {}),
    )(gamma, beta, x_ncl)

    # (N, C, H*W) -> (N, C, H, W): free reshape.
    return out.reshape(N, C, H, W)


def ibn_reference(x, in_weight, in_bias, bn_weight, bn_bias, *, ratio=0.5):
    """Pure-JAX reference mirroring the PyTorch forward (BN in training mode)."""
    N, C, H, W = x.shape
    half = int(C * ratio)
    x1, x2 = x[:, :half], x[:, half:]
    # InstanceNorm2d (affine)
    m1 = jnp.mean(x1, axis=(2, 3), keepdims=True)
    v1 = jnp.mean((x1 - m1) ** 2, axis=(2, 3), keepdims=True)
    o1 = (x1 - m1) / jnp.sqrt(v1 + EPS)
    o1 = o1 * in_weight[None, :, None, None] + in_bias[None, :, None, None]
    # BatchNorm2d (batch stats, biased variance)
    m2 = jnp.mean(x2, axis=(0, 2, 3), keepdims=True)
    v2 = jnp.mean((x2 - m2) ** 2, axis=(0, 2, 3), keepdims=True)
    o2 = (x2 - m2) / jnp.sqrt(v2 + EPS)
    o2 = o2 * bn_weight[None, :, None, None] + bn_bias[None, :, None, None]
    return jnp.concatenate([o1, o2], axis=1)


if __name__ == "__main__":
    key = jax.random.PRNGKey(0)
    N, C, H, W = 2, 4, 16, 16
    half = C // 2

    x = jax.random.normal(key, (N, C, H, W), dtype=jnp.float32)

    # Deterministic parameter init, matching the module's __init__:
    # IN.weight=1, IN.bias=0; BatchNorm2d default weight=1, bias=0.
    in_weight = jnp.ones((half,), jnp.float32)
    in_bias = jnp.zeros((half,), jnp.float32)
    bn_weight = jnp.ones((C - half,), jnp.float32)
    bn_bias = jnp.zeros((C - half,), jnp.float32)

    out = ibn_forward(x, in_weight, in_bias, bn_weight, bn_bias)
    out = jax.block_until_ready(out)

    ref = ibn_reference(x, in_weight, in_bias, bn_weight, bn_bias)
    assert out.shape == (N, C, H, W)
    assert jnp.allclose(out, ref, atol=1e-4, rtol=1e-4)

    print("KERNEL_OK")
</pallas_src>

<mosaic_0001>
module attributes {stable_mosaic.version = 11 : i64} {
  func.func @_ibn_kernel(%arg0: i32, %arg1: memref<4x1xf32, #tpu.memory_space<vmem>>, %arg2: memref<4x1xf32, #tpu.memory_space<vmem>>, %arg3: memref<2x4x256xf32, #tpu.memory_space<vmem>>, %arg4: memref<2x4x256xf32, #tpu.memory_space<vmem>>) attributes {dimension_semantics = [#tpu.dimension_semantics<parallel>], iteration_bounds = array<i64: 1>, scalar_prefetch = 0 : i64, scratch_operands = 0 : i64, tpu.core_type = #tpu.core_type<tc>, window_params = [{pipeline_mode = #tpu.pipeline_mode<synchronous>, transform_indices = @transform_0, window_bounds = array<i64: 4, 1>}, {pipeline_mode = #tpu.pipeline_mode<synchronous>, transform_indices = @transform_1, window_bounds = array<i64: 4, 1>}, {transform_indices = @transform_2, window_bounds = array<i64: 2, 4, 256>}, {transform_indices = @transform_3, window_bounds = array<i64: 2, 4, 256>}]} {
    %c4_i32 = arith.constant 4 : i32
    %0 = arith.muli %arg0, %c4_i32 : i32
    %1 = tpu.assume_multiple %0, 4 : i32
    %c0 = arith.constant 0 : index
    %c0_0 = arith.constant 0 : index
    %c0_1 = arith.constant 0 : index
    %2 = vector.load %arg3[%c0, %c0_0, %c0_1] : memref<2x4x256xf32, #tpu.memory_space<vmem>>, vector<2x4x256xf32>
    %cst = arith.constant dense<0.000000e+00> : vector<2x4xf32>
    %3 = vector.multi_reduction <add>, %2, %cst [2] : vector<2x4x256xf32> to vector<2x4xf32>
    %4 = vector.shape_cast %3 : vector<2x4xf32> to vector<2x4x1xf32>
    %5 = arith.mulf %2, %2 : vector<2x4x256xf32>
    %cst_2 = arith.constant dense<0.000000e+00> : vector<2x4xf32>
    %6 = vector.multi_reduction <add>, %5, %cst_2 [2] : vector<2x4x256xf32> to vector<2x4xf32>
    %7 = vector.shape_cast %6 : vector<2x4xf32> to vector<2x4x1xf32>
    %cst_3 = arith.constant 3.906250e-03 : f32
    %8 = vector.broadcast %cst_3 : f32 to vector<2x4x1xf32>
    %9 = arith.mulf %4, %8 : vector<2x4x1xf32>
    %cst_4 = arith.constant 3.906250e-03 : f32
    %10 = vector.broadcast %cst_4 : f32 to vector<2x4x1xf32>
    %11 = arith.mulf %7, %10 : vector<2x4x1xf32>
    %12 = arith.mulf %9, %9 : vector<2x4x1xf32>
    %13 = arith.subf %11, %12 : vector<2x4x1xf32>
    %cst_5 = arith.constant dense<0.000000e+00> : vector<4x1xf32>
    %14 = vector.multi_reduction <add>, %9, %cst_5 [0] : vector<2x4x1xf32> to vector<4x1xf32>
    %15 = vector.shape_cast %14 : vector<4x1xf32> to vector<1x4x1xf32>
    %cst_6 = arith.constant 2.000000e+00 : f32
    %16 = vector.broadcast %cst_6 : f32 to vector<1x4x1xf32>
    %17 = arith.divf %15, %16 : vector<1x4x1xf32>
    %cst_7 = arith.constant dense<0.000000e+00> : vector<4x1xf32>
    %18 = vector.multi_reduction <add>, %11, %cst_7 [0] : vector<2x4x1xf32> to vector<4x1xf32>
    %19 = vector.shape_cast %18 : vector<4x1xf32> to vector<1x4x1xf32>
    %cst_8 = arith.constant 2.000000e+00 : f32
    %20 = vector.broadcast %cst_8 : f32 to vector<1x4x1xf32>
    %21 = arith.divf %19, %20 : vector<1x4x1xf32>
    %22 = arith.mulf %17, %17 : vector<1x4x1xf32>
    %23 = arith.subf %21, %22 : vector<1x4x1xf32>
    %24 = tpu.iota {dimensions = array<i32: 1>} : vector<1x4x1xi32>
    %25 = vector.broadcast %1 : i32 to vector<1x4x1xi32>
    %26 = arith.addi %25, %24 : vector<1x4x1xi32>
    %c2_i32 = arith.constant 2 : i32
    %27 = vector.broadcast %c2_i32 : i32 to vector<1x4x1xi32>
    %28 = arith.cmpi slt, %26, %27 : vector<1x4x1xi32>
    %29 = vector.shape_cast %28 : vector<1x4x1xi1> to vector<1x4x1xi1>
    %30 = vector.broadcast %29 : vector<1x4x1xi1> to vector<2x4x1xi1>
    %31 = vector.shape_cast %17 : vector<1x4x1xf32> to vector<1x4x1xf32>
    %32 = vector.broadcast %31 : vector<1x4x1xf32> to vector<2x4x1xf32>
    %33 = arith.select %30, %9, %32 : vector<2x4x1xi1>, vector<2x4x1xf32>
    %34 = vector.shape_cast %28 : vector<1x4x1xi1> to vector<1x4x1xi1>
    %35 = vector.broadcast %34 : vector<1x4x1xi1> to vector<2x4x1xi1>
    %36 = vector.shape_cast %23 : vector<1x4x1xf32> to vector<1x4x1xf32>
    %37 = vector.broadcast %36 : vector<1x4x1xf32> to vector<2x4x1xf32>
    %38 = arith.select %35, %13, %37 : vector<2x4x1xi1>, vector<2x4x1xf32>
    %cst_9 = arith.constant 0.000000e+00 : f32
    %39 = vector.broadcast %cst_9 : f32 to vector<2x4x1xf32>
    %40 = arith.maximumf %38, %39 : vector<2x4x1xf32>
    %41 = arith.index_cast %1 : i32 to index
    %c0_10 = arith.constant 0 : index
    %42 = vector.load %arg1[%41, %c0_10] : memref<4x1xf32, #tpu.memory_space<vmem>>, vector<4x1xf32>
    %43 = vector.shape_cast %42 : vector<4x1xf32> to vector<1x4x1xf32>
    %44 = arith.index_cast %1 : i32 to index
    %c0_11 = arith.constant 0 : index
    %45 = vector.load %arg2[%44, %c0_11] : memref<4x1xf32, #tpu.memory_space<vmem>>, vector<4x1xf32>
    %46 = vector.shape_cast %45 : vector<4x1xf32> to vector<1x4x1xf32>
    %cst_12 = arith.constant 9.99999974E-6 : f32
    %47 = vector.broadcast %cst_12 : f32 to vector<2x4x1xf32>
    %48 = arith.addf %40, %47 : vector<2x4x1xf32>
    %49 = math.rsqrt %48 : vector<2x4x1xf32>
    %50 = vector.broadcast %43 : vector<1x4x1xf32> to vector<2x4x1xf32>
    %51 = arith.mulf %49, %50 : vector<2x4x1xf32>
    %52 = arith.mulf %33, %51 : vector<2x4x1xf32>
    %53 = vector.broadcast %46 : vector<1x4x1xf32> to vector<2x4x1xf32>
    %54 = arith.subf %53, %52 : vector<2x4x1xf32>
    %55 = vector.broadcast %51 : vector<2x4x1xf32> to vector<2x4x256xf32>
    %56 = arith.mulf %2, %55 : vector<2x4x256xf32>
    %57 = vector.broadcast %54 : vector<2x4x1xf32> to vector<2x4x256xf32>
    %58 = arith.addf %56, %57 : vector<2x4x256xf32>
    %c0_13 = arith.constant 0 : index
    %c0_14 = arith.constant 0 : index
    %c0_15 = arith.constant 0 : index
    %59 = vector.load %arg4[%c0_13, %c0_14, %c0_15] : memref<2x4x256xf32, #tpu.memory_space<vmem>>, vector<2x4x256xf32>
    tpu.vector_store %arg4[%c0_13, %c0_14, %c0_15], %58 {strides = array<i32>} : memref<2x4x256xf32, #tpu.memory_space<vmem>>, vector<2x4x256xf32>,
    return
  }
  func.func @transform_0(%arg0: i32) -> (i32, i32) {
    %c0_i32 = arith.constant 0 : i32
    %c0_i32_0 = arith.constant 0 : i32
    %c0_i32_1 = arith.constant 0 : i32
    return %c0_i32, %c0_i32_0 : i32, i32
  }
  func.func @transform_1(%arg0: i32) -> (i32, i32) {
    %c0_i32 = arith.constant 0 : i32
    %c0_i32_0 = arith.constant 0 : i32
    %c0_i32_1 = arith.constant 0 : i32
    return %c0_i32, %c0_i32_0 : i32, i32
  }
  func.func @transform_2(%arg0: i32) -> (i32, i32, i32) {
    %c0_i32 = arith.constant 0 : i32
    %c0_i32_0 = arith.constant 0 : i32
    %c0_i32_1 = arith.constant 0 : i32
    return %c0_i32, %arg0, %c0_i32_0 : i32, i32, i32
  }
  func.func @transform_3(%arg0: i32) -> (i32, i32, i32) {
    %c0_i32 = arith.constant 0 : i32
    %c0_i32_0 = arith.constant 0 : i32
    %c0_i32_1 = arith.constant 0 : i32
    return %c0_i32, %arg0, %c0_i32_0 : i32, i32, i32
  }
}

</mosaic_0001>

<llo_original>
// kernel: tpu_custom_call.1
$region0: #{tpu_custom_call.1}
  #allocation0 [shape = 'u32[]', space=smem, size = 0x4, offset = 0x4, fixed_abs, tag = 'smem constant byte address 0x4 - core index']
  #allocation1 [shape = 'u32[144,128]{1,0:T(1,128)}', space=vmem, size = 0x12000, scoped, tag = 'internal scratch']
  %s0 = inlined_call_operand.vmem [shape: f32[4,1], index: 0, kind: input, shape index: {}]
  %s1 = inlined_call_operand.vmem [shape: f32[4,1], index: 1, kind: input, shape index: {}]
  %s2 = inlined_call_operand.hbm [shape: f32[2,4,256], index: 2, kind: input, shape index: {}]
  %s3 = inlined_call_operand.hbm [shape: f32[2,4,256], index: 3, kind: output, shape index: {}]
  %s4 = sld [smem:[#allocation0]]
  $region26: #{tpu_custom_call.1} parent=0
    _
  %s6 = ssub.s32 1, %s4
  %s7 = scalar_select 0, %s6, %s4
  $region1: #{tpu_custom_call.1} parent=0
    #allocation2 [shape = 'u8[8192]{0}', space=vmem, size = 0x2000, scoped, tag = 'input window, operand 2, single buffered']
    #allocation3 [shape = 's32[1]{0}', space=sflag, size = 0x4, scoped, tag = 'scoped memory for tpu_custom_call.1']
    #allocation4 [shape = 's32[1]{0}', space=sflag, size = 0x4, scoped, tag = 'scoped memory for tpu_custom_call.1']
    #allocation5 [shape = 'u8[8192]{0}', space=vmem, size = 0x2000, scoped, tag = 'output window, operand 0, single buffered']
    %8 = vsyncpa [#allocation3], 0
    %9 = vsyncpa [#allocation4], 0
    // Predicated region
    $region2: #{tpu_custom_call.1} parent=1 // pred_check
      _
    $region3: #{tpu_custom_call.1} parent=1 // pred_check_branch
      %11 = sbr.rel (0) target = $region5
    $region4: #{tpu_custom_call.1} parent=1 // pred_region
      _
    $region5: #{tpu_custom_call.1} parent=1 // pred_fallthru
      _
    // Predicated region
    $region6: #{tpu_custom_call.1} parent=1 // pred_check
      _
    $region7: #{tpu_custom_call.1} parent=1 // pred_check_branch
      %13 = sbr.rel (0) target = $region9
    $region8: #{tpu_custom_call.1} parent=1 // pred_region
      _
    $region9: #{tpu_custom_call.1} parent=1 // pred_fallthru
      _
    // Predicated region
    $region10: #{tpu_custom_call.1} parent=1 // pred_check
      _
    $region11: #{tpu_custom_call.1} parent=1 // pred_check_branch
      %15 = sbr.rel (0) target = $region13
    $region12: #{tpu_custom_call.1} parent=1 // pred_region
      %s17 = ssub.s32 256, 256
      %18 = vsyncadd [#allocation3], %s17
      %s19 = sshll.u32 [#allocation2], 4
      %s20 = int_to_ptr.vmem [resolvable:$true] %s19
      %25 = dma.hbm_to_vmem [thread:$0]  %s2, 256, %s20, [#allocation3], 128, 128, 8
    $region13: #{tpu_custom_call.1} parent=1 // pred_fallthru
      _
    // Predicated region
    $region14: #{tpu_custom_call.1} parent=1 // pred_check
      _
    $region15: #{tpu_custom_call.1} parent=1 // pred_check_branch
      %27 = sbr.rel (0) target = $region17
    $region16: #{tpu_custom_call.1} parent=1 // pred_region
      %28 = dma.done [#allocation3], 256
    $region17: #{tpu_custom_call.1} parent=1 // pred_fallthru
      _
    %s29 = smul.u32 0, 4
    %v30 = vld [vmem:[#allocation2] sm:$0xff]
    %v31 = vld [vmem:[#allocation2 + $0x8] sm:$0xff]
    %v34 = vcombine.high %v30, %v30
    %v35 = vcombine.high %v31, %v31
    %vm38 = vcmask 1043456
    %v39 = vsel %vm38, %v30, 0.0
    %v40 = vsel %vm38, %v34, 0.0
    %v41 = vadd.f32 %v39, %v40
    %42 = vadd.xlane.f32.xlu0 %v41
    %v43 = vpop.xlane.xlu0 %42
    %v44 = vsel %vm38, %v31, 0.0
    %v45 = vsel %vm38, %v35, 0.0
    %v46 = vadd.f32 %v44, %v45
    %47 = vadd.xlane.f32.xlu0 %v46
    %v48 = vpop.xlane.xlu0 %47
    %v49 = vmul.f32 %v30, %v30
    %v50 = vmul.f32 %v31, %v31
    %v53 = vcombine.high %v49, %v49
    %v54 = vcombine.high %v50, %v50
    %v57 = vsel %vm38, %v49, 0.0
    %v58 = vsel %vm38, %v53, 0.0
    %v59 = vadd.f32 %v57, %v58
    %60 = vadd.xlane.f32.xlu0 %v59
    %v61 = vpop.xlane.xlu0 %60
    %v62 = vsel %vm38, %v50, 0.0
    %v63 = vsel %vm38, %v54, 0.0
    %v64 = vadd.f32 %v62, %v63
    %65 = vadd.xlane.f32.xlu0 %v64
    %v66 = vpop.xlane.xlu0 %65
    %v67 = vmul.f32 %v43, 0.00390625
    %v68 = vmul.f32 %v48, 0.00390625
    %v69 = vmul.f32 %v61, 0.00390625
    %v70 = vmul.f32 %v66, 0.00390625
    %v71 = vmul.f32 %v67, %v67
    %v72 = vmul.f32 %v68, %v68
    %v73 = vsub.f32 %v69, %v71
    %v74 = vsub.f32 %v70, %v72
    %v75 = vsel %vm38, %v67, 0.0
    %v76 = vsel %vm38, %v68, 0.0
    %v77 = vadd.f32 %v75, %v76
    %v78 = vrcp.pop 2.0
    %v79 = vmul.f32 %v77, %v78
    %v80 = vsel %vm38, %v69, 0.0
    %v81 = vsel %vm38, %v70, 0.0
    %v82 = vadd.f32 %v80, %v81
    %v83 = vmul.f32 %v82, %v78
    %v84 = vmul.f32 %v79, %v79
    %v85 = vsub.f32 %v83, %v84
    %v86 = vlaneseq
    %v87 = vshrl.u32 %v86, 7
    %v88 = vstv %s29
    %v89 = vadd.s32 %v88, %v87
    %vm90 = vcmp.lt.s32.totalorder %v89, 2
    %v91 = vsel %vm90, 1, 0
    %vm92 = vcmp.eq.s32.totalorder %v91, 1
    %v93 = vsel %vm92, %v67, %v79
    %v94 = vsel %vm92, %v68, %v79
    %v95 = vsel %vm92, %v73, %v85
    %v96 = vsel %vm92, %v74, %v85
    %v97 = vmax.f32 %v95, 0.0
    %v98 = vmax.f32 %v96, 0.0
    %s99 = scalar_lea.vmem %s0, %s29
    %v100 = vld [vmem:[%s99] sm:$0xf]
    %s101 = scalar_lea.vmem %s1, %s29
    %v102 = vld [vmem:[%s101] sm:$0xf]
    %v103 = vadd.f32 %v97, 1e-05
    %v104 = vadd.f32 %v98, 1e-05
    %v105 = vrsqrt.pop %v103
    %v106 = vrsqrt.pop %v104
    %v107 = vmul.f32 %v105, %v100
    %v108 = vmul.f32 %v106, %v100
    %v109 = vmul.f32 %v93, %v107
    %v110 = vmul.f32 %v94, %v108
    %v111 = vsub.f32 %v102, %v109
    %v112 = vsub.f32 %v102, %v110
    %114 = vset.pattern.permute.xlu0 0
    %115 = vperm.xlu0 %114, %v107
    %v116 = vpop.permute.xlu0 %115
    %118 = vset.pattern.permute.xlu0 0
    %119 = vperm.xlu0 %118, %v108
    %v120 = vpop.permute.xlu0 %119
    %v122 = vunpack.c.l.s4 839922192
    %v123 = vunpack.c.0.s8 %v122
    %v124 = vlaneseq
    %v125 = vshrl.u32 %v124, 7
    %v126 = vsub.s32 %v123, %v125
    %v127 = vrot.slane %v116, %v126
    %v129 = vunpack.c.l.s4 839922192
    %v130 = vunpack.c.0.s8 %v129
    %v131 = vlaneseq
    %v132 = vshrl.u32 %v131, 7
    %v133 = vsub.s32 %v130, %v132
    %v134 = vrot.slane %v120, %v133
    %v137 = vmul.f32 %v30, %v127
    %v138 = vmul.f32 %v31, %v134
    %140 = vset.pattern.permute.xlu0 0
    %141 = vperm.xlu0 %140, %v111
    %v142 = vpop.permute.xlu0 %141
    %144 = vset.pattern.permute.xlu0 0
    %145 = vperm.xlu0 %144, %v112
    %v146 = vpop.permute.xlu0 %145
    %v148 = vunpack.c.l.s4 839922192
    %v149 = vunpack.c.0.s8 %v148
    %v150 = vlaneseq
    %v151 = vshrl.u32 %v150, 7
    %v152 = vsub.s32 %v149, %v151
    %v153 = vrot.slane %v142, %v152
    %v155 = vunpack.c.l.s4 839922192
    %v156 = vunpack.c.0.s8 %v155
    %v157 = vlaneseq
    %v158 = vshrl.u32 %v157, 7
    %v159 = vsub.s32 %v156, %v158
    %v160 = vrot.slane %v146, %v159
    %v163 = vadd.f32 %v137, %v153
    %v164 = vadd.f32 %v138, %v160
    %165 = vst [vmem:[#allocation5] sm:$0xff] %v163
    %166 = vst [vmem:[#allocation5 + $0x8] sm:$0xff] %v164
    // Predicated region
    $region18: #{tpu_custom_call.1} parent=1 // pred_check
      _
    $region19: #{tpu_custom_call.1} parent=1 // pred_check_branch
      %168 = sbr.rel (0) target = $region21
    $region20: #{tpu_custom_call.1} parent=1 // pred_region
      %s170 = ssub.s32 256, 256
      %171 = vsyncadd [#allocation4], %s170
      %s172 = sshll.u32 [#allocation5], 4
      %s173 = int_to_ptr.vmem [resolvable:$true] %s172
      %178 = dma.vmem_to_hbm [thread:$0]  %s173, 256, %s3, [#allocation4], 128, 128, 8
    $region21: #{tpu_custom_call.1} parent=1 // pred_fallthru
      _
    // Predicated region
    $region22: #{tpu_custom_call.1} parent=1 // pred_check
      _
    $region23: #{tpu_custom_call.1} parent=1 // pred_check_branch
      %180 = sbr.rel (0) target = $region25
    $region24: #{tpu_custom_call.1} parent=1 // pred_region
      %181 = dma.done [#allocation4], 256
    $region25: #{tpu_custom_call.1} parent=1 // pred_fallthru
      _
    %182 = vsyncpa [#allocation3], 1
    %183 = vsyncpa [#allocation4], 1

</llo_original>
